<compile_context>
chip_gen: v5e
topology: v5e:2x2
jax: 0.10.0
libtpu: 0.0.40
codegen_flags: <defaults>
</compile_context>

<pallas_src>
import functools

import jax
import jax.numpy as jnp
from jax import lax
from jax.experimental import pallas as pl
from jax.experimental.pallas import tpu as pltpu


def _ca_block_kernel(gamma_ref, x_ref, o_ref, *, matmul_dtype):
    # gamma_ref: (1, 1) f32 in SMEM
    # x_ref    : (BB, C, HW) f32 in VMEM
    # o_ref    : (BB, C, HW)
    x = x_ref[...]                                             # (BB, C, HW) f32
    xm = x.astype(matmul_dtype)

    # energy[b, i, j] = <x_bi, x_bj>: batched gram matrix, contracting the
    # lane (HW) axis of both operands -- trans-B matmul on the MXU, no
    # materialized transpose.
    energy = jnp.einsum("bcn,bdn->bcd", xm, xm,
                        preferred_element_type=jnp.float32)    # (BB, C, C)

    # Numerically stable softmax numerator; denominator is folded into the
    # final per-row scale (no (C,C) divide pass).  All reductions in f32
    # (v5e VPU has no bf16).
    m = jnp.max(energy, axis=-1, keepdims=True)                # (BB, C, 1)
    e = jnp.exp(energy - m)                                    # (BB, C, C)
    l = jnp.sum(e, axis=-1, keepdims=True)                     # (BB, C, 1)

    # Un-normalized attention applied to V (= X).
    out_un = jnp.einsum("bcd,bdn->bcn", e.astype(matmul_dtype), xm,
                        preferred_element_type=jnp.float32)    # (BB, C, HW)

    # One fused per-row scale: gamma * softmax-denominator reciprocal (EUP).
    scale = gamma_ref[0, 0] * pl.reciprocal(l, approx=True)    # (BB, C, 1)
    o_ref[...] = (scale * out_un + x).astype(o_ref.dtype)


def ca_block(x, gamma, *, use_bf16_matmul=False, max_block_bytes=8 << 20):
    """x: (B, C, H, W) f32 (NCHW, as in the PyTorch module); gamma: (1,) f32.

    use_bf16_matmul: cast MXU operands to bf16 (f32 accumulation kept). Only
    worthwhile at large C / H*W on v6e/v7x; off by default at small shapes
    since it costs precision for no measurable speedup here.
    """
    B, C, H, W = x.shape
    HW = H * W
    x_flat = x.reshape(B, C, HW)                   # lane axis = HW (128-dense)
    gamma_arr = jnp.asarray(gamma, jnp.float32).reshape(1, 1)

    # Pack as many batch elements per grid step as the VMEM budget allows:
    # double-buffered in + out blocks = 4 * BB * C * HW * 4 bytes, kept under
    # max_block_bytes (default 8 MiB -> safe under v5e's 16 MiB scoped VMEM
    # default and v6e/v7x's 32 MiB), capped at 64 elements/step.  BB is the
    # largest divisor of B under that cap so blocks tile B exactly.
    bytes_per_elem = C * HW * 4
    cap = max(1, min(64, max_block_bytes // (4 * bytes_per_elem)))
    bb = 1
    for d in range(1, B + 1):
        if B % d == 0 and d <= cap:
            bb = d
    n_blocks = B // bb

    matmul_dtype = jnp.bfloat16 if use_bf16_matmul else jnp.float32
    kernel = functools.partial(_ca_block_kernel, matmul_dtype=matmul_dtype)

    cost = pl.CostEstimate(
        flops=4 * B * C * C * HW,            # two (C,C,HW) matmuls per element
        transcendentals=B * C * C + B * C,   # exp + per-row reciprocal
        bytes_accessed=2 * B * C * HW * 4,   # read x + write out
    )

    out_flat = pl.pallas_call(
        kernel,
        out_shape=jax.ShapeDtypeStruct((B, C, HW), x.dtype),
        grid=(n_blocks,),
        in_specs=[
            pl.BlockSpec(memory_space=pltpu.MemorySpace.SMEM),   # gamma scalar
            pl.BlockSpec((bb, C, HW), lambda b: (b, 0, 0)),      # BB batch elems
        ],
        out_specs=pl.BlockSpec((bb, C, HW), lambda b: (b, 0, 0)),
        compiler_params=pltpu.CompilerParams(
            dimension_semantics=("parallel",)),                  # v7x megacore
        cost_estimate=cost,
    )(gamma_arr, x_flat)
    return out_flat.reshape(B, C, H, W)


# Pure-JAX reference for the correctness check (high precision to match the
# kernel's f32 MXU accumulation).
def _ref_ca_block(x, gamma):
    B, C, H, W = x.shape
    xf = x.reshape(B, C, H * W)
    energy = jnp.einsum("bcn,bdn->bcd", xf, xf,
                        precision=lax.Precision.HIGHEST)
    attn = jax.nn.softmax(energy, axis=-1)
    out = jnp.einsum("bcd,bdn->bcn", attn, xf,
                     precision=lax.Precision.HIGHEST)
    return gamma.reshape(()) * out.reshape(B, C, H, W) + x


if __name__ == "__main__":
    B, C, H, W = 2, 16, 16, 16
    x = jax.random.normal(jax.random.PRNGKey(0), (B, C, H, W), jnp.float32)
    gamma = jnp.ones((1,), jnp.float32)     # nn.Parameter(torch.ones(1)) init

    fwd = jax.jit(ca_block)
    out = fwd(x, gamma)
    jax.block_until_ready(out)

    ref = _ref_ca_block(x, gamma)
    jax.block_until_ready(ref)

    assert out.shape == (B, C, H, W), out.shape
    max_err = float(jnp.max(jnp.abs(out - ref)))
    assert jnp.allclose(out, ref, atol=2e-3, rtol=2e-3), max_err
    print("KERNEL_OK")
</pallas_src>

<mosaic_0001>
module attributes {stable_mosaic.version = 11 : i64} {
  func.func @_ca_block_kernel(%arg0: i32, %arg1: memref<1x1xf32, #tpu.memory_space<smem>>, %arg2: memref<2x16x256xf32, #tpu.memory_space<vmem>>, %arg3: memref<2x16x256xf32, #tpu.memory_space<vmem>>) attributes {dimension_semantics = [#tpu.dimension_semantics<parallel>], iteration_bounds = array<i64: 1>, scalar_prefetch = 0 : i64, scratch_operands = 0 : i64, tpu.core_type = #tpu.core_type<tc>, window_params = [{transform_indices = @transform_0, window_bounds = array<i64: 1, 1>}, {transform_indices = @transform_1, window_bounds = array<i64: 2, 16, 256>}, {transform_indices = @transform_2, window_bounds = array<i64: 2, 16, 256>}]} {
    %c0 = arith.constant 0 : index
    %c0_0 = arith.constant 0 : index
    %c0_1 = arith.constant 0 : index
    %0 = vector.load %arg2[%c0, %c0_0, %c0_1] : memref<2x16x256xf32, #tpu.memory_space<vmem>>, vector<2x16x256xf32>
    "tpu.trace_start"() <{level = 10 : i32, message = "bcn,bdn->bcd"}> : () -> ()
    %cst = arith.constant dense<0.000000e+00> : vector<2x16x16xf32>
    %1 = tpu.matmul %0, %0, %cst {dimension_numbers = #tpu.dot_dimension_numbers<[2], [2], [1], [1], [0, 0, 0, 1, 1, 1], [0], [0]>} : vector<2x16x256xf32>, vector<2x16x256xf32>, vector<2x16x16xf32> -> vector<2x16x16xf32>
    "tpu.trace_stop"() : () -> ()
    %cst_2 = arith.constant dense<0xFF800000> : vector<2x16xf32>
    %2 = vector.multi_reduction <maximumf>, %1, %cst_2 [2] : vector<2x16x16xf32> to vector<2x16xf32>
    %3 = vector.shape_cast %2 : vector<2x16xf32> to vector<2x16x1xf32>
    %4 = vector.broadcast %3 : vector<2x16x1xf32> to vector<2x16x16xf32>
    %5 = arith.subf %1, %4 : vector<2x16x16xf32>
    %6 = math.exp %5 : vector<2x16x16xf32>
    %cst_3 = arith.constant dense<0.000000e+00> : vector<2x16xf32>
    %7 = vector.multi_reduction <add>, %6, %cst_3 [2] : vector<2x16x16xf32> to vector<2x16xf32>
    %8 = vector.shape_cast %7 : vector<2x16xf32> to vector<2x16x1xf32>
    "tpu.trace_start"() <{level = 10 : i32, message = "bcd,bdn->bcn"}> : () -> ()
    %cst_4 = arith.constant dense<0.000000e+00> : vector<2x16x256xf32>
    %9 = tpu.matmul %6, %0, %cst_4 {dimension_numbers = #tpu.dot_dimension_numbers<[2], [1], [1], [2], [0, 0, 0, 1, 1, 2], [0], [0]>} : vector<2x16x16xf32>, vector<2x16x256xf32>, vector<2x16x256xf32> -> vector<2x16x256xf32>
    "tpu.trace_stop"() : () -> ()
    %c0_5 = arith.constant 0 : index
    %c0_6 = arith.constant 0 : index
    %10 = memref.load %arg1[%c0_5, %c0_6] : memref<1x1xf32, #tpu.memory_space<smem>>
    %11 = tpu.reciprocal %8 {approx = true} : vector<2x16x1xf32> -> vector<2x16x1xf32>
    %12 = vector.broadcast %10 : f32 to vector<2x16x1xf32>
    %13 = arith.mulf %12, %11 : vector<2x16x1xf32>
    %14 = vector.broadcast %13 : vector<2x16x1xf32> to vector<2x16x256xf32>
    %15 = arith.mulf %14, %9 : vector<2x16x256xf32>
    %16 = arith.addf %15, %0 : vector<2x16x256xf32>
    %c0_7 = arith.constant 0 : index
    %c0_8 = arith.constant 0 : index
    %c0_9 = arith.constant 0 : index
    %17 = vector.load %arg3[%c0_7, %c0_8, %c0_9] : memref<2x16x256xf32, #tpu.memory_space<vmem>>, vector<2x16x256xf32>
    tpu.vector_store %arg3[%c0_7, %c0_8, %c0_9], %16 {strides = array<i32>} : memref<2x16x256xf32, #tpu.memory_space<vmem>>, vector<2x16x256xf32>,
    return
  }
  func.func @transform_0(%arg0: i32) -> (i32, i32) {
    %c0_i32 = arith.constant 0 : i32
    %c0_i32_0 = arith.constant 0 : i32
    %c0_i32_1 = arith.constant 0 : i32
    return %c0_i32, %c0_i32_0 : i32, i32
  }
  func.func @transform_1(%arg0: i32) -> (i32, i32, i32) {
    %c0_i32 = arith.constant 0 : i32
    %c0_i32_0 = arith.constant 0 : i32
    %c0_i32_1 = arith.constant 0 : i32
    return %arg0, %c0_i32, %c0_i32_0 : i32, i32, i32
  }
  func.func @transform_2(%arg0: i32) -> (i32, i32, i32) {
    %c0_i32 = arith.constant 0 : i32
    %c0_i32_0 = arith.constant 0 : i32
    %c0_i32_1 = arith.constant 0 : i32
    return %arg0, %c0_i32, %c0_i32_0 : i32, i32, i32
  }
}

</mosaic_0001>

<llo_original>
// kernel: ca_block.1
$region0: #{ca_block.1}
  #allocation0 [shape = 'u32[]', space=smem, size = 0x4, offset = 0x4, fixed_abs, tag = 'smem constant byte address 0x4 - core index']
  #allocation1 [shape = 'u32[72,128]{1,0:T(1,128)}', space=vmem, size = 0x9000, scoped, tag = 'internal scratch']
  #allocation2 [shape = 'f32[1,1]{1,0:T(1,128)S(6)}', space=smem, size = 0x200, scoped, tag = 'scoped memory for ca_block.1']
  %s0 = inlined_call_operand.<no memory space> [shape: f32[1,1], index: 0, kind: input, shape index: {}]
  %s1 = inlined_call_operand.vmem [shape: f32[2,16,256], index: 1, kind: input, shape index: {}]
  %s2 = inlined_call_operand.vmem [shape: f32[2,16,256], index: 2, kind: output, shape index: {}]
  %s3 = sld [smem:[#allocation0]]
  $region18: #{ca_block.1} parent=0
    _
  %s5 = ssub.s32 1, %s3
  %s6 = scalar_select 0, %s5, %s3
  %7 = sst [smem:[#allocation2]] %s0
  // Predicated region
  $region2: #{ca_block.1} parent=0 // pred_check
    _
  $region3: #{ca_block.1} parent=0 // pred_check_branch
    %9 = sbr.rel (0) target = $region5
  $region4: #{ca_block.1} parent=0 // pred_region
    _
  $region5: #{ca_block.1} parent=0 // pred_fallthru
    _
  // Predicated region
  $region6: #{ca_block.1} parent=0 // pred_check
    _
  $region7: #{ca_block.1} parent=0 // pred_check_branch
    %11 = sbr.rel (0) target = $region9
  $region8: #{ca_block.1} parent=0 // pred_region
    _
  $region9: #{ca_block.1} parent=0 // pred_fallthru
    _
  %v12 = vld [vmem:[%s1] sm:$0xff]
  %v13 = vld [vmem:[%s1 + $0x8] sm:$0xff]
  %v14 = vld [vmem:[%s1 + $0x10] sm:$0xff]
  %v15 = vld [vmem:[%s1 + $0x18] sm:$0xff]
  %v16 = vld [vmem:[%s1 + $0x20] sm:$0xff]
  %v17 = vld [vmem:[%s1 + $0x28] sm:$0xff]
  %v18 = vld [vmem:[%s1 + $0x30] sm:$0xff]
  %v19 = vld [vmem:[%s1 + $0x38] sm:$0xff]
  %20 = vmatpush.xpose.msra.mxu0 0.0
  %21 = vmatpush.xpose.msra.mxu0 0.0
  %22 = vmatpush.xpose.msra.mxu0 0.0
  %23 = vmatpush.xpose.msra.mxu0 0.0
  %24 = vmatpush.xpose.msra.mxu0 0.0
  %25 = vmatpush.xpose.msra.mxu0 0.0
  %26 = vmatpush.xpose.msra.mxu0 0.0
  %27 = vmatpush.xpose.msra.mxu0 0.0
  %28 = vmatpush.xpose.msra.mxu0 0.0
  %29 = vmatpush.xpose.msra.mxu0 0.0
  %30 = vmatpush.xpose.msra.mxu0 0.0
  %31 = vmatpush.xpose.msra.mxu0 0.0
  %32 = vmatpush.xpose.msra.mxu0 0.0
  %33 = vmatpush.xpose.msra.mxu0 0.0
  %34 = vmatpush.xpose.msra.mxu0 %v14
  %35 = vmatpush.xpose.msra.mxu0 %v12
  %36 = vmatmul.f32.gmra.mxu0 %v12
  %v37 = vpop.f32.mrf.mxu0
  %v38 = vadd.f32 0.0, %v37
  %39 = vmatmul.f32.gmra.mxu0 %v14
  %v40 = vpop.f32.mrf.mxu0
  %v41 = vadd.f32 0.0, %v40
  %42 = vdwg.mxu0
  %43 = vmatpush.xpose.msra.mxu0 0.0
  %44 = vmatpush.xpose.msra.mxu0 0.0
  %45 = vmatpush.xpose.msra.mxu0 0.0
  %46 = vmatpush.xpose.msra.mxu0 0.0
  %47 = vmatpush.xpose.msra.mxu0 0.0
  %48 = vmatpush.xpose.msra.mxu0 0.0
  %49 = vmatpush.xpose.msra.mxu0 0.0
  %50 = vmatpush.xpose.msra.mxu0 0.0
  %51 = vmatpush.xpose.msra.mxu0 0.0
  %52 = vmatpush.xpose.msra.mxu0 0.0
  %53 = vmatpush.xpose.msra.mxu0 0.0
  %54 = vmatpush.xpose.msra.mxu0 0.0
  %55 = vmatpush.xpose.msra.mxu0 0.0
  %56 = vmatpush.xpose.msra.mxu0 0.0
  %57 = vmatpush.xpose.msra.mxu0 %v15
  %58 = vmatpush.xpose.msra.mxu0 %v13
  %59 = vmatmul.f32.gmra.mxu0 %v13
  %v60 = vpop.f32.mrf.mxu0
  %v61 = vadd.f32 %v38, %v60
  %62 = vmatmul.f32.gmra.mxu0 %v15
  %v63 = vpop.f32.mrf.mxu0
  %v64 = vadd.f32 %v41, %v63
  %65 = vdwg.mxu0
  %66 = vmatpush.xpose.msra.mxu0 0.0
  %67 = vmatpush.xpose.msra.mxu0 0.0
  %68 = vmatpush.xpose.msra.mxu0 0.0
  %69 = vmatpush.xpose.msra.mxu0 0.0
  %70 = vmatpush.xpose.msra.mxu0 0.0
  %71 = vmatpush.xpose.msra.mxu0 0.0
  %72 = vmatpush.xpose.msra.mxu0 0.0
  %73 = vmatpush.xpose.msra.mxu0 0.0
  %74 = vmatpush.xpose.msra.mxu0 0.0
  %75 = vmatpush.xpose.msra.mxu0 0.0
  %76 = vmatpush.xpose.msra.mxu0 0.0
  %77 = vmatpush.xpose.msra.mxu0 0.0
  %78 = vmatpush.xpose.msra.mxu0 0.0
  %79 = vmatpush.xpose.msra.mxu0 0.0
  %80 = vmatpush.xpose.msra.mxu0 %v18
  %81 = vmatpush.xpose.msra.mxu0 %v16
  %82 = vmatmul.f32.gmra.mxu0 %v16
  %v83 = vpop.f32.mrf.mxu0
  %v84 = vadd.f32 0.0, %v83
  %85 = vmatmul.f32.gmra.mxu0 %v18
  %v86 = vpop.f32.mrf.mxu0
  %v87 = vadd.f32 0.0, %v86
  %88 = vdwg.mxu0
  %89 = vmatpush.xpose.msra.mxu0 0.0
  %90 = vmatpush.xpose.msra.mxu0 0.0
  %91 = vmatpush.xpose.msra.mxu0 0.0
  %92 = vmatpush.xpose.msra.mxu0 0.0
  %93 = vmatpush.xpose.msra.mxu0 0.0
  %94 = vmatpush.xpose.msra.mxu0 0.0
  %95 = vmatpush.xpose.msra.mxu0 0.0
  %96 = vmatpush.xpose.msra.mxu0 0.0
  %97 = vmatpush.xpose.msra.mxu0 0.0
  %98 = vmatpush.xpose.msra.mxu0 0.0
  %99 = vmatpush.xpose.msra.mxu0 0.0
  %100 = vmatpush.xpose.msra.mxu0 0.0
  %101 = vmatpush.xpose.msra.mxu0 0.0
  %102 = vmatpush.xpose.msra.mxu0 0.0
  %103 = vmatpush.xpose.msra.mxu0 %v19
  %104 = vmatpush.xpose.msra.mxu0 %v17
  %105 = vmatmul.f32.gmra.mxu0 %v17
  %v106 = vpop.f32.mrf.mxu0
  %v107 = vadd.f32 %v84, %v106
  %108 = vmatmul.f32.gmra.mxu0 %v19
  %v109 = vpop.f32.mrf.mxu0
  %v110 = vadd.f32 %v87, %v109
  %111 = vdwg.mxu0
  %vm112 = vcmask 130048
  %v113 = vsel %vm112, %v61, -inf
  %114 = vmax.xlane.f32.xlu0 %v113
  %v115 = vpop.xlane.xlu0 %114
  %v116 = vsel %vm112, %v64, -inf
  %117 = vmax.xlane.f32.xlu0 %v116
  %v118 = vpop.xlane.xlu0 %117
  %v119 = vsel %vm112, %v107, -inf
  %120 = vmax.xlane.f32.xlu0 %v119
  %v121 = vpop.xlane.xlu0 %120
  %v122 = vsel %vm112, %v110, -inf
  %123 = vmax.xlane.f32.xlu0 %v122
  %v124 = vpop.xlane.xlu0 %123
  %v125 = vsub.f32 %v61, %v115
  %v126 = vsub.f32 %v64, %v118
  %v127 = vsub.f32 %v107, %v121
  %v128 = vsub.f32 %v110, %v124
  %v129 = vmul.f32 %v125, 1.442695
  %v130 = vpow.pop %v129
  %v131 = vmul.f32 %v126, 1.442695
  %v132 = vpow.pop %v131
  %v133 = vmul.f32 %v127, 1.442695
  %v134 = vpow.pop %v133
  %v135 = vmul.f32 %v128, 1.442695
  %v136 = vpow.pop %v135
  %v137 = vsel %vm112, %v130, 0.0
  %138 = vadd.xlane.f32.xlu0 %v137
  %v139 = vpop.xlane.xlu0 %138
  %v140 = vsel %vm112, %v132, 0.0
  %141 = vadd.xlane.f32.xlu0 %v140
  %v142 = vpop.xlane.xlu0 %141
  %v143 = vsel %vm112, %v134, 0.0
  %144 = vadd.xlane.f32.xlu0 %v143
  %v145 = vpop.xlane.xlu0 %144
  %v146 = vsel %vm112, %v136, 0.0
  %147 = vadd.xlane.f32.xlu0 %v146
  %v148 = vpop.xlane.xlu0 %147
  %v150 = vsel %vm112, %v130, 0
  %v153 = vsel %vm112, %v132, 0
  %155 = vmatpush.msra.mxu0 0.0
  %156 = vmatpush.msra.mxu0 0.0
  %157 = vmatpush.msra.mxu0 0.0
  %158 = vmatpush.msra.mxu0 0.0
  %159 = vmatpush.msra.mxu0 0.0
  %160 = vmatpush.msra.mxu0 0.0
  %161 = vmatpush.msra.mxu0 0.0
  %162 = vmatpush.msra.mxu0 0.0
  %163 = vmatpush.msra.mxu0 0.0
  %164 = vmatpush.msra.mxu0 0.0
  %165 = vmatpush.msra.mxu0 0.0
  %166 = vmatpush.msra.mxu0 0.0
  %167 = vmatpush.msra.mxu0 0.0
  %168 = vmatpush.msra.mxu0 0.0
  %169 = vmatpush.msra.mxu0 %v14
  %170 = vmatpush.msra.mxu0 %v12
  %171 = vmatmul.f32.gmra.mxu0 %v150
  %v172 = vpop.f32.mrf.mxu0
  %v173 = vadd.f32 0.0, %v172
  %174 = vmatmul.f32.gmra.mxu0 %v153
  %v175 = vpop.f32.mrf.mxu0
  %v176 = vadd.f32 0.0, %v175
  %177 = vdwg.mxu0
  %178 = vmatpush.msra.mxu0 0.0
  %179 = vmatpush.msra.mxu0 0.0
  %180 = vmatpush.msra.mxu0 0.0
  %181 = vmatpush.msra.mxu0 0.0
  %182 = vmatpush.msra.mxu0 0.0
  %183 = vmatpush.msra.mxu0 0.0
  %184 = vmatpush.msra.mxu0 0.0
  %185 = vmatpush.msra.mxu0 0.0
  %186 = vmatpush.msra.mxu0 0.0
  %187 = vmatpush.msra.mxu0 0.0
  %188 = vmatpush.msra.mxu0 0.0
  %189 = vmatpush.msra.mxu0 0.0
  %190 = vmatpush.msra.mxu0 0.0
  %191 = vmatpush.msra.mxu0 0.0
  %192 = vmatpush.msra.mxu0 %v15
  %193 = vmatpush.msra.mxu0 %v13
  %194 = vmatmul.f32.gmra.mxu0 %v150
  %v195 = vpop.f32.mrf.mxu0
  %v196 = vadd.f32 0.0, %v195
  %197 = vmatmul.f32.gmra.mxu0 %v153
  %v198 = vpop.f32.mrf.mxu0
  %v199 = vadd.f32 0.0, %v198
  %200 = vdwg.mxu0
  %v202 = vsel %vm112, %v134, 0
  %v205 = vsel %vm112, %v136, 0
  %207 = vmatpush.msra.mxu0 0.0
  %208 = vmatpush.msra.mxu0 0.0
  %209 = vmatpush.msra.mxu0 0.0
  %210 = vmatpush.msra.mxu0 0.0
  %211 = vmatpush.msra.mxu0 0.0
  %212 = vmatpush.msra.mxu0 0.0
  %213 = vmatpush.msra.mxu0 0.0
  %214 = vmatpush.msra.mxu0 0.0
  %215 = vmatpush.msra.mxu0 0.0
  %216 = vmatpush.msra.mxu0 0.0
  %217 = vmatpush.msra.mxu0 0.0
  %218 = vmatpush.msra.mxu0 0.0
  %219 = vmatpush.msra.mxu0 0.0
  %220 = vmatpush.msra.mxu0 0.0
  %221 = vmatpush.msra.mxu0 %v18
  %222 = vmatpush.msra.mxu0 %v16
  %223 = vmatmul.f32.gmra.mxu0 %v202
  %v224 = vpop.f32.mrf.mxu0
  %v225 = vadd.f32 0.0, %v224
  %226 = vmatmul.f32.gmra.mxu0 %v205
  %v227 = vpop.f32.mrf.mxu0
  %v228 = vadd.f32 0.0, %v227
  %229 = vdwg.mxu0
  %230 = vmatpush.msra.mxu0 0.0
  %231 = vmatpush.msra.mxu0 0.0
  %232 = vmatpush.msra.mxu0 0.0
  %233 = vmatpush.msra.mxu0 0.0
  %234 = vmatpush.msra.mxu0 0.0
  %235 = vmatpush.msra.mxu0 0.0
  %236 = vmatpush.msra.mxu0 0.0
  %237 = vmatpush.msra.mxu0 0.0
  %238 = vmatpush.msra.mxu0 0.0
  %239 = vmatpush.msra.mxu0 0.0
  %240 = vmatpush.msra.mxu0 0.0
  %241 = vmatpush.msra.mxu0 0.0
  %242 = vmatpush.msra.mxu0 0.0
  %243 = vmatpush.msra.mxu0 0.0
  %244 = vmatpush.msra.mxu0 %v19
  %245 = vmatpush.msra.mxu0 %v17
  %246 = vmatmul.f32.gmra.mxu0 %v202
  %v247 = vpop.f32.mrf.mxu0
  %v248 = vadd.f32 0.0, %v247
  %249 = vmatmul.f32.gmra.mxu0 %v205
  %v250 = vpop.f32.mrf.mxu0
  %v251 = vadd.f32 0.0, %v250
  %252 = vdwg.mxu0
  %s253 = sld [smem:[#allocation2]]
  %v254 = vrcp.pop %v139
  %v255 = vrcp.pop %v142
  %v256 = vrcp.pop %v145
  %v257 = vrcp.pop %v148
  %v258 = vstv %s253
  %v259 = vmul.f32 %v258, %v254
  %v260 = vmul.f32 %v258, %v255
  %v261 = vmul.f32 %v258, %v256
  %v262 = vmul.f32 %v258, %v257
  %v263 = vmul.f32 %v259, %v173
  %v264 = vmul.f32 %v259, %v196
  %v265 = vmul.f32 %v260, %v176
  %v266 = vmul.f32 %v260, %v199
  %v267 = vmul.f32 %v261, %v225
  %v268 = vmul.f32 %v261, %v248
  %v269 = vmul.f32 %v262, %v228
  %v270 = vmul.f32 %v262, %v251
  %v271 = vadd.f32 %v263, %v12
  %v272 = vadd.f32 %v264, %v13
  %v273 = vadd.f32 %v265, %v14
  %v274 = vadd.f32 %v266, %v15
  %v275 = vadd.f32 %v267, %v16
  %v276 = vadd.f32 %v268, %v17
  %v277 = vadd.f32 %v269, %v18
  %v278 = vadd.f32 %v270, %v19
  %279 = vst [vmem:[%s2] sm:$0xff] %v271
  %280 = vst [vmem:[%s2 + $0x8] sm:$0xff] %v272
  %281 = vst [vmem:[%s2 + $0x10] sm:$0xff] %v273
  %282 = vst [vmem:[%s2 + $0x18] sm:$0xff] %v274
  %283 = vst [vmem:[%s2 + $0x20] sm:$0xff] %v275
  %284 = vst [vmem:[%s2 + $0x28] sm:$0xff] %v276
  %285 = vst [vmem:[%s2 + $0x30] sm:$0xff] %v277
  %286 = vst [vmem:[%s2 + $0x38] sm:$0xff] %v278
  // Predicated region
  $region10: #{ca_block.1} parent=0 // pred_check
    _
  $region11: #{ca_block.1} parent=0 // pred_check_branch
    %288 = sbr.rel (0) target = $region13
  $region12: #{ca_block.1} parent=0 // pred_region
    _
  $region13: #{ca_block.1} parent=0 // pred_fallthru
    _
  // Predicated region
  $region14: #{ca_block.1} parent=0 // pred_check
    _
  $region15: #{ca_block.1} parent=0 // pred_check_branch
    %290 = sbr.rel (0) target = $region17
  $region16: #{ca_block.1} parent=0 // pred_region
    _
  $region17: #{ca_block.1} parent=0 // pred_fallthru
    _

</llo_original>
